<compile_context>
chip_gen: v7x
topology: tpu7x:2x2x1
jax: 0.10.0
libtpu: 0.0.40
codegen_flags: <defaults>
</compile_context>

<pallas_src>
import functools

import jax
import jax.numpy as jnp
from jax.experimental import pallas as pl
from jax.experimental.pallas import tpu as pltpu


# ---------------------------------------------------------------------------
# Kernels (generic over layout: spatial_axis=2 -> (B, C, HW), =1 -> (B, HW, C))
# ---------------------------------------------------------------------------

def _se_fused_kernel(x_ref, w1t_ref, w2t_ref, o_ref, *, inv_hw, spatial_axis):
    """Fused squeeze + excitation + scale for one batch element.

    x_ref   : (1, C, HW) or (1, HW, C) input slab
    w1t_ref : (C, C_red)  fc1 weight, pre-transposed, f32, resident in VMEM
    w2t_ref : (C_red, C)  fc2 weight, pre-transposed, f32, resident in VMEM
    o_ref   : same shape as x_ref
    """
    # Promote once to f32: guarantees f32 pooling accumulation for bf16 inputs
    # and an f32 gate multiply (matches reference numerics; on v5e the VPU has
    # no bf16 VALU anyway).  No-op for f32 inputs.
    xf = x_ref[...].astype(jnp.float32)

    # Squeeze: global average pool = sum * (1/HW).
    pooled = jnp.sum(xf, axis=spatial_axis) * inv_hw               # (1, C)

    # Excitation: Linear -> ReLU -> Linear -> Sigmoid (tiny MXU matmuls).
    h = jnp.maximum(
        jnp.dot(pooled, w1t_ref[...], preferred_element_type=jnp.float32), 0.0)
    z = jnp.dot(h, w2t_ref[...], preferred_element_type=jnp.float32)
    y = pl.reciprocal(1.0 + jnp.exp(-z), approx=False)             # (1, C) f32

    # Scale: per-channel gate broadcast over the spatial axis; downcast only
    # at the store.
    o_ref[...] = (xf * jnp.expand_dims(y, spatial_axis)).astype(o_ref.dtype)


def _se_pool_kernel(x_ref, sum_ref, *, hw, s_tile, n_s, spatial_axis):
    """Pass 1 (two-pass path): accumulate per-channel spatial sums.

    x_ref   : (1, C, s_tile) or (1, s_tile, C) spatial tile of x
    sum_ref : (1, C, 1)      or (1, 1, C)      resident f32 accumulator
    """
    s = pl.program_id(1)

    @pl.when(s == 0)
    def _():
        sum_ref[...] = jnp.zeros_like(sum_ref)

    def _accum(mask_tail):
        xf = x_ref[...].astype(jnp.float32)          # f32 accumulation
        if mask_tail:
            pos = (jax.lax.broadcasted_iota(jnp.int32, xf.shape, spatial_axis)
                   + s * s_tile)
            xf = jnp.where(pos < hw, xf, 0.0)
        sum_ref[...] += jnp.sum(xf, axis=spatial_axis, keepdims=True)

    if hw % s_tile == 0:
        _accum(False)                                # common path: never masked
    else:
        # Only the last (partial) tile pays for the iota + compare + select.
        @pl.when(s < n_s - 1)
        def _():
            _accum(False)

        @pl.when(s == n_s - 1)
        def _():
            _accum(True)


def _se_scale_kernel(x_ref, psum_ref, w1t_ref, w2t_ref, o_ref, gate_ref,
                     *, inv_hw, spatial_axis):
    """Pass 2 (two-pass path): excitation fused into the rescale stream.

    x_ref    : (1, C, s_tile) / (1, s_tile, C)
    psum_ref : (1, C, 1) / (1, 1, C)   f32 pooled sums (resident, constant in s)
    w1t_ref  : (C, C_red)  f32, resident
    w2t_ref  : (C_red, C)  f32, resident
    o_ref    : same shape as x_ref
    gate_ref : VMEM scratch, (1, C, 1) / (1, 1, C) f32 sigmoid gates
    """
    @pl.when(pl.program_id(1) == 0)
    def _():
        # Tiny matmuls run once per batch element on the otherwise-idle MXU.
        pooled = jnp.sum(psum_ref[...], axis=spatial_axis) * inv_hw   # (1, C)
        h = jnp.maximum(
            jnp.dot(pooled, w1t_ref[...], preferred_element_type=jnp.float32),
            0.0)
        z = jnp.dot(h, w2t_ref[...], preferred_element_type=jnp.float32)
        gate_ref[...] = jnp.expand_dims(
            pl.reciprocal(1.0 + jnp.exp(-z), approx=False), spatial_axis)

    # f32 multiply, downcast only at the store.
    o_ref[...] = (x_ref[...].astype(jnp.float32) * gate_ref[...]).astype(
        o_ref.dtype)


# ---------------------------------------------------------------------------
# Wrapper helpers
# ---------------------------------------------------------------------------

def _vmem_limit_bytes():
    """VMEM budget at ~85% of the physical per-core capacity of this chip."""
    cap = 64 << 20  # conservative default: v7x physical VMEM per TensorCore
    try:
        cap = int(getattr(pltpu.get_tpu_info(), "vmem_capacity_bytes", cap))
    except Exception:
        pass
    return min(int(cap * 0.85), 110 << 20)


def _batch_semantics(override=None):
    """'parallel' on 1-TC chips; CORE_PARALLEL when >=2 TensorCores (v7x)."""
    if override is not None:
        return pltpu.CORE_PARALLEL if override else "parallel"
    try:
        info = pltpu.get_tpu_info()
        for attr in ("num_cores", "num_tensorcores", "tensorcore_count"):
            v = getattr(info, attr, None)
            if isinstance(v, int) and v >= 2:
                return pltpu.CORE_PARALLEL
    except Exception:
        pass
    return "parallel"   # safe default: single-TC chips / unknown hardware


def _se_forward_3d(x3, w1t, w2t, *, spatial_axis, force_two_pass,
                   spatial_tile, batch_core_parallel):
    """SE forward on a 3-D view of x.

    spatial_axis == 2 : x3 is (B, C, HW)   (NCHW producer; HW on lanes)
    spatial_axis == 1 : x3 is (B, HW, C)   (NHWC producer; C on lanes)
    """
    B = x3.shape[0]
    if spatial_axis == 2:
        C, HW = int(x3.shape[1]), int(x3.shape[2])
        granule = 128                       # spatial dim is the lane axis
        full_blk = (1, C, HW)
        blk = lambda s: (1, C, s)
        x_idx = lambda b, s: (b, 0, s)
        red_blk = (1, C, 1)
    else:
        HW, C = int(x3.shape[1]), int(x3.shape[2])
        granule = 8                         # spatial dim is the sublane axis
        full_blk = (1, HW, C)
        blk = lambda s: (1, s, C)
        x_idx = lambda b, s: (b, s, 0)
        red_blk = (1, 1, C)

    C_red = int(w1t.shape[1])
    itemsize = x3.dtype.itemsize
    inv_hw = 1.0 / HW

    batch_sem = _batch_semantics(batch_core_parallel)
    vmem_limit = _vmem_limit_bytes()

    weight_bytes = 4 * 2 * C * C_red            # w1t + w2t, f32
    scratch_headroom = 2 << 20                  # compiler scratch, gates, etc.
    slab_bytes = C * HW * itemsize
    f32_temp = C * HW * 4 if itemsize < 4 else 0  # in-kernel f32 promotion temp
    # 2 double-buffered input blocks + 2 output blocks + one live f32 temp
    # + resident weights + headroom must fit the (raised) VMEM limit.
    fused_need = 4 * slab_bytes + f32_temp + weight_bytes + scratch_headroom
    use_fused = (not force_two_pass and spatial_tile is None
                 and fused_need <= vmem_limit)

    if use_fused:
        # ---- Single fused pass, grid over batch: x read once, written once.
        cost = pl.CostEstimate(
            flops=3 * B * C * HW + 4 * B * C * C_red,
            transcendentals=B * C,
            bytes_accessed=2 * B * slab_bytes + weight_bytes)
        return pl.pallas_call(
            functools.partial(_se_fused_kernel, inv_hw=inv_hw,
                              spatial_axis=spatial_axis),
            out_shape=jax.ShapeDtypeStruct(x3.shape, x3.dtype),
            grid_spec=pltpu.PrefetchScalarGridSpec(
                num_scalar_prefetch=0,
                grid=(B,),
                in_specs=[
                    pl.BlockSpec(full_blk, lambda b: (b, 0, 0)),
                    # Constant index_maps: weights DMA'd once, stay resident.
                    pl.BlockSpec((C, C_red), lambda b: (0, 0)),
                    pl.BlockSpec((C_red, C), lambda b: (0, 0)),
                ],
                out_specs=pl.BlockSpec(full_blk, lambda b: (b, 0, 0)),
            ),
            compiler_params=pltpu.CompilerParams(
                dimension_semantics=(batch_sem,),
                vmem_limit_bytes=vmem_limit,
            ),
            cost_estimate=cost,
        )(x3, w1t, w2t)

    # ---- Two-pass fallback: per-batch slab too large for VMEM (or forced).
    budget = max(vmem_limit - weight_bytes - scratch_headroom,
                 16 * granule * C)

    def _pick_tile(bytes_per_s):
        if spatial_tile is not None:
            assert spatial_tile == HW or spatial_tile % granule == 0, (
                f"spatial_tile must be a multiple of {granule} or equal H*W")
            return spatial_tile
        max_s = max(granule, budget // bytes_per_s)
        if HW <= max_s:
            return HW                        # single tile == full dim (legal)
        return max(granule, (max_s // granule) * granule)

    # Pass 1 only double-buffers the input (the reduced accumulator is
    # resident), so its tile is sized from ~2x+temp bytes per spatial position
    # -> roughly 2x larger tiles / half the grid steps vs pass 2.
    s_tile1 = _pick_tile(C * (2 * itemsize + 4))
    s_tile2 = _pick_tile(C * (4 * itemsize + (4 if itemsize < 4 else 0)))
    n_s1 = pl.cdiv(HW, s_tile1)
    n_s2 = pl.cdiv(HW, s_tile2)

    red_shape = (B,) + red_blk[1:]
    red_idx = lambda b, s: (b, 0, 0)

    # Pass 1: tiled global average pool (resident f32 accumulator over the
    # spatial grid axis, init via pl.when, last-tile-only masking).
    pooled_sum = pl.pallas_call(
        functools.partial(_se_pool_kernel, hw=HW, s_tile=s_tile1, n_s=n_s1,
                          spatial_axis=spatial_axis),
        out_shape=jax.ShapeDtypeStruct(red_shape, jnp.float32),
        grid_spec=pltpu.PrefetchScalarGridSpec(
            num_scalar_prefetch=0,
            grid=(B, n_s1),
            in_specs=[pl.BlockSpec(blk(s_tile1), x_idx)],
            out_specs=pl.BlockSpec(red_blk, red_idx),
        ),
        compiler_params=pltpu.CompilerParams(
            dimension_semantics=(batch_sem, "arbitrary"),
            vmem_limit_bytes=vmem_limit,
        ),
        cost_estimate=pl.CostEstimate(
            flops=B * C * HW, transcendentals=0,
            bytes_accessed=B * slab_bytes + B * C * 4),
    )(x3)

    # Pass 2: excitation (fused, runs once per batch element at s==0 into a
    # VMEM gate scratch) + tiled channel-wise rescale.
    out3 = pl.pallas_call(
        functools.partial(_se_scale_kernel, inv_hw=inv_hw,
                          spatial_axis=spatial_axis),
        out_shape=jax.ShapeDtypeStruct(x3.shape, x3.dtype),
        grid_spec=pltpu.PrefetchScalarGridSpec(
            num_scalar_prefetch=0,
            grid=(B, n_s2),
            in_specs=[
                pl.BlockSpec(blk(s_tile2), x_idx),
                pl.BlockSpec(red_blk, red_idx),
                pl.BlockSpec((C, C_red), lambda b, s: (0, 0)),
                pl.BlockSpec((C_red, C), lambda b, s: (0, 0)),
            ],
            out_specs=pl.BlockSpec(blk(s_tile2), x_idx),
            scratch_shapes=[pltpu.VMEM(red_blk, jnp.float32)],
        ),
        compiler_params=pltpu.CompilerParams(
            dimension_semantics=(batch_sem, "arbitrary"),
            vmem_limit_bytes=vmem_limit,
        ),
        cost_estimate=pl.CostEstimate(
            flops=2 * B * C * HW + 4 * B * C * C_red,
            transcendentals=B * C,
            bytes_accessed=2 * B * slab_bytes + B * C * 4 + weight_bytes),
    )(x3, pooled_sum, w1t, w2t)
    return out3


# ---------------------------------------------------------------------------
# Public wrappers
# ---------------------------------------------------------------------------

def se_layer(x, w1, w2, *, force_two_pass=False, spatial_tile=None,
             batch_core_parallel=None):
    """Squeeze-and-Excitation forward, NCHW (matches the PyTorch module).

    x  : (B, C, H, W)
    w1 : (C_red, C)  fc[0].weight  (nn.Linear(channel, channel//reduction, bias=False))
    w2 : (C, C_red)  fc[2].weight  (nn.Linear(channel//reduction, channel, bias=False))
    """
    B, C, H, W = x.shape
    C_red = w1.shape[0]
    assert w1.shape == (C_red, C) and w2.shape == (C, C_red)
    x3 = x.reshape(B, C, H * W)           # metadata-only; HW is the lane axis
    w1t = w1.T.astype(jnp.float32)        # pre-cast once in the wrapper
    w2t = w2.T.astype(jnp.float32)
    out3 = _se_forward_3d(x3, w1t, w2t, spatial_axis=2,
                          force_two_pass=force_two_pass,
                          spatial_tile=spatial_tile,
                          batch_core_parallel=batch_core_parallel)
    return out3.reshape(B, C, H, W)


def se_layer_nhwc(x, w1, w2, *, force_two_pass=False, spatial_tile=None,
                  batch_core_parallel=None):
    """Channels-last variant for producers that already emit NHWC.

    Keeps C on the lane axis (dense stores when C % 128 == 0) with no wrapper
    transpose.  x : (B, H, W, C); weights as in `se_layer`.
    """
    B, H, W, C = x.shape
    C_red = w1.shape[0]
    assert w1.shape == (C_red, C) and w2.shape == (C, C_red)
    x3 = x.reshape(B, H * W, C)           # metadata-only; C is the lane axis
    w1t = w1.T.astype(jnp.float32)
    w2t = w2.T.astype(jnp.float32)
    out3 = _se_forward_3d(x3, w1t, w2t, spatial_axis=1,
                          force_two_pass=force_two_pass,
                          spatial_tile=spatial_tile,
                          batch_core_parallel=batch_core_parallel)
    return out3.reshape(B, H, W, C)


def se_reference(x, w1, w2):
    """Pure-JAX reference mirroring the PyTorch forward exactly (NCHW)."""
    pooled = jnp.mean(x.astype(jnp.float32), axis=(2, 3))         # (B, C)
    h = jnp.maximum(pooled @ w1.T.astype(jnp.float32), 0.0)       # (B, C_red)
    y = jax.nn.sigmoid(h @ w2.T.astype(jnp.float32))              # (B, C)
    return (x.astype(jnp.float32) * y[:, :, None, None]).astype(x.dtype)


if __name__ == "__main__":
    # channel must be divisible by reduction (default 16): C=64 -> C_red=4.
    B, C, reduction = 2, 64, 16
    C_red = C // reduction

    key = jax.random.PRNGKey(0)
    kx, kw1, kw2, kx2, kx3 = jax.random.split(key, 5)

    # init.normal_(weight, std=0.001), bias-free Linear layers.
    w1 = 0.001 * jax.random.normal(kw1, (C_red, C), dtype=jnp.float32)
    w2 = 0.001 * jax.random.normal(kw2, (C, C_red), dtype=jnp.float32)

    # 1) Fused single-pass path (NCHW, slab fits VMEM).
    x = jax.random.normal(kx, (B, C, 16, 16), dtype=jnp.float32)
    out = jax.block_until_ready(se_layer(x, w1, w2))
    ref = se_reference(x, w1, w2)
    assert out.shape == x.shape and out.dtype == x.dtype
    assert jnp.allclose(out, ref, atol=1e-5, rtol=1e-5), "fused NCHW mismatch"

    # 2) Two-pass path (forced) with a partial last lane tile
    #    (15*15 = 225, not a multiple of 128) to exercise accumulator init,
    #    last-tile-only masking, and the fused in-kernel excitation.
    x2 = jax.random.normal(kx2, (B, C, 15, 15), dtype=jnp.float32)
    out2 = jax.block_until_ready(
        se_layer(x2, w1, w2, force_two_pass=True, spatial_tile=128))
    ref2 = se_reference(x2, w1, w2)
    assert out2.shape == x2.shape and out2.dtype == x2.dtype
    assert jnp.allclose(out2, ref2, atol=1e-5, rtol=1e-5), "two-pass NCHW mismatch"

    # 3) Channels-last (NHWC) fused variant.
    x3 = jax.random.normal(kx3, (B, 9, 9, C), dtype=jnp.float32)
    out3 = jax.block_until_ready(se_layer_nhwc(x3, w1, w2))
    ref3 = jnp.transpose(
        se_reference(jnp.transpose(x3, (0, 3, 1, 2)), w1, w2), (0, 2, 3, 1))
    assert out3.shape == x3.shape and out3.dtype == x3.dtype
    assert jnp.allclose(out3, ref3, atol=1e-5, rtol=1e-5), "fused NHWC mismatch"

    # 4) Channels-last two-pass path (forced) with a partial last sublane tile
    #    (81 spatial positions, tile 8).
    out4 = jax.block_until_ready(
        se_layer_nhwc(x3, w1, w2, force_two_pass=True, spatial_tile=8))
    assert jnp.allclose(out4, ref3, atol=1e-5, rtol=1e-5), "two-pass NHWC mismatch"

    print("KERNEL_OK")
</pallas_src>

<mosaic_0001>
module attributes {stable_mosaic.version = 11 : i64} {
  func.func @_se_fused_kernel(%arg0: i32, %arg1: memref<1x64x256xf32, #tpu.memory_space<vmem>>, %arg2: memref<64x4xf32, #tpu.memory_space<vmem>>, %arg3: memref<4x64xf32, #tpu.memory_space<vmem>>, %arg4: memref<1x64x256xf32, #tpu.memory_space<vmem>>) attributes {dimension_semantics = [#tpu.dimension_semantics<parallel>], iteration_bounds = array<i64: 2>, scalar_prefetch = 0 : i64, scratch_operands = 0 : i64, tpu.core_type = #tpu.core_type<tc>, window_params = [{transform_indices = @transform_0, window_bounds = array<i64: 1, 64, 256>}, {pipeline_mode = #tpu.pipeline_mode<synchronous>, transform_indices = @transform_1, window_bounds = array<i64: 64, 4>}, {pipeline_mode = #tpu.pipeline_mode<synchronous>, transform_indices = @transform_2, window_bounds = array<i64: 4, 64>}, {transform_indices = @transform_3, window_bounds = array<i64: 1, 64, 256>}]} {
    %c0 = arith.constant 0 : index
    %c0_0 = arith.constant 0 : index
    %c0_1 = arith.constant 0 : index
    %0 = vector.load %arg1[%c0, %c0_0, %c0_1] : memref<1x64x256xf32, #tpu.memory_space<vmem>>, vector<1x64x256xf32>
    %cst = arith.constant dense<0.000000e+00> : vector<1x64xf32>
    %1 = vector.multi_reduction <add>, %0, %cst [2] : vector<1x64x256xf32> to vector<1x64xf32>
    %cst_2 = arith.constant 3.906250e-03 : f32
    %2 = vector.broadcast %cst_2 : f32 to vector<1x64xf32>
    %3 = arith.mulf %1, %2 : vector<1x64xf32>
    %c0_3 = arith.constant 0 : index
    %c0_4 = arith.constant 0 : index
    %4 = vector.load %arg2[%c0_3, %c0_4] : memref<64x4xf32, #tpu.memory_space<vmem>>, vector<64x4xf32>
    %cst_5 = arith.constant dense<0.000000e+00> : vector<1x4xf32>
    %5 = tpu.matmul %3, %4, %cst_5 {dimension_numbers = #tpu.dot_dimension_numbers<[1], [0], [0], [1], [0, 0, 1, 1], [], []>} : vector<1x64xf32>, vector<64x4xf32>, vector<1x4xf32> -> vector<1x4xf32>
    %cst_6 = arith.constant 0.000000e+00 : f32
    %6 = vector.broadcast %cst_6 : f32 to vector<1x4xf32>
    %7 = arith.maximumf %5, %6 : vector<1x4xf32>
    %c0_7 = arith.constant 0 : index
    %c0_8 = arith.constant 0 : index
    %8 = vector.load %arg3[%c0_7, %c0_8] : memref<4x64xf32, #tpu.memory_space<vmem>>, vector<4x64xf32>
    %cst_9 = arith.constant dense<0.000000e+00> : vector<1x64xf32>
    %9 = tpu.matmul %7, %8, %cst_9 {dimension_numbers = #tpu.dot_dimension_numbers<[1], [0], [0], [1], [0, 0, 1, 1], [], []>} : vector<1x4xf32>, vector<4x64xf32>, vector<1x64xf32> -> vector<1x64xf32>
    %cst_10 = arith.constant 0.000000e+00 : f32
    %10 = vector.broadcast %cst_10 : f32 to vector<1x64xf32>
    %11 = arith.subf %10, %9 : vector<1x64xf32>
    %12 = math.exp %11 : vector<1x64xf32>
    %cst_11 = arith.constant 1.000000e+00 : f32
    %13 = vector.broadcast %cst_11 : f32 to vector<1x64xf32>
    %14 = arith.addf %13, %12 : vector<1x64xf32>
    %15 = tpu.reciprocal %14 : vector<1x64xf32> -> vector<1x64xf32>
    %16 = vector.shape_cast %15 : vector<1x64xf32> to vector<1x64x1xf32>
    %17 = vector.broadcast %16 : vector<1x64x1xf32> to vector<1x64x256xf32>
    %18 = arith.mulf %0, %17 : vector<1x64x256xf32>
    %c0_12 = arith.constant 0 : index
    %c0_13 = arith.constant 0 : index
    %c0_14 = arith.constant 0 : index
    %19 = vector.load %arg4[%c0_12, %c0_13, %c0_14] : memref<1x64x256xf32, #tpu.memory_space<vmem>>, vector<1x64x256xf32>
    tpu.vector_store %arg4[%c0_12, %c0_13, %c0_14], %18 {strides = array<i32>} : memref<1x64x256xf32, #tpu.memory_space<vmem>>, vector<1x64x256xf32>,
    return
  }
  func.func @transform_0(%arg0: i32) -> (i32, i32, i32) {
    %c0_i32 = arith.constant 0 : i32
    %c0_i32_0 = arith.constant 0 : i32
    %c0_i32_1 = arith.constant 0 : i32
    return %arg0, %c0_i32, %c0_i32_0 : i32, i32, i32
  }
  func.func @transform_1(%arg0: i32) -> (i32, i32) {
    %c0_i32 = arith.constant 0 : i32
    %c0_i32_0 = arith.constant 0 : i32
    %c0_i32_1 = arith.constant 0 : i32
    return %c0_i32, %c0_i32_0 : i32, i32
  }
  func.func @transform_2(%arg0: i32) -> (i32, i32) {
    %c0_i32 = arith.constant 0 : i32
    %c0_i32_0 = arith.constant 0 : i32
    %c0_i32_1 = arith.constant 0 : i32
    return %c0_i32, %c0_i32_0 : i32, i32
  }
  func.func @transform_3(%arg0: i32) -> (i32, i32, i32) {
    %c0_i32 = arith.constant 0 : i32
    %c0_i32_0 = arith.constant 0 : i32
    %c0_i32_1 = arith.constant 0 : i32
    return %arg0, %c0_i32, %c0_i32_0 : i32, i32, i32
  }
}

</mosaic_0001>

<llo_original>
// kernel: tpu_custom_call.1
$region0: #{tpu_custom_call.1}
  #allocation0 [shape = 'u32[]', space=smem, size = 0x4, offset = 0x4, fixed_abs, tag = 'smem constant byte address 0x4 - core index']
  #allocation1 [shape = 'u32[144,128]{1,0:T(1,128)}', space=vmem, size = 0x12000, scoped, tag = 'internal scratch']
  %s0 = inlined_call_operand.hbm [shape: f32[2,64,256], index: 0, kind: input, shape index: {}]
  %s1 = inlined_call_operand.vmem [shape: f32[64,4], index: 1, kind: input, shape index: {}]
  %s2 = inlined_call_operand.vmem [shape: f32[4,64], index: 2, kind: input, shape index: {}]
  %s3 = inlined_call_operand.hbm [shape: f32[2,64,256], index: 3, kind: output, shape index: {}]
  %s4 = sld [smem:[#allocation0]]
  $region49: #{tpu_custom_call.1} parent=0
    _
  %s6 = ssub.s32 1, %s4
  %s7 = scalar_select 0, %s6, %s4
  $region1: #{tpu_custom_call.1} parent=0
    #allocation2 [shape = 'u8[131072]{0}', space=vmem, size = 0x20000, scoped, tag = 'input window, operand 0']
    #allocation3 [shape = 's32[2]{0}', space=sflag, size = 0x8, scoped, tag = 'scoped memory for tpu_custom_call.1']
    #allocation4 [shape = 's32[2]{0}', space=sflag, size = 0x8, scoped, tag = 'scoped memory for tpu_custom_call.1']
    #allocation5 [shape = 'u8[131072]{0}', space=vmem, size = 0x20000, scoped, tag = 'output window, operand 0']
    %8 = vsyncpa [#allocation3], 0
    %s9 = scalar_lea.sflag [#allocation3], 1
    %10 = vsyncpa %s9, 0
    %11 = vsyncpa [#allocation4], 0
    %s12 = scalar_lea.sflag [#allocation4], 1
    %13 = vsyncpa %s12, 0
    loop: start=0, step=1, limit=4
    $region2: #{tpu_custom_call.1} parent=1 // loop_pre_header
      _
    $region3: #{tpu_custom_call.1} parent=1 // loop_header
      %s15 = sphi 0, %s19
      %p16 = scmp.ge.s32.totalorder %s15, 4
      %s25 = sphi 0, %s27
      %s28 = sphi 0, %s25
      %s29 = sphi 0, %s28
      %s45 = sphi 0, %s29
      %s49 = sphi 0, %s49
      %s51 = sphi 0, %s49
      %s52 = sphi 0, %s51
      %s66 = sphi 0, %s52
      %s70 = sphi 0, %s70
      %s72 = sphi 0, %s70
      %s73 = sphi 0, %s72
      %s87 = sphi 0, %s73
      %s93 = sphi 0, %s95
      %s96 = sphi 0, %s93
      %s97 = sphi 0, %s96
      %s113 = sphi 0, %s97
    $region4: #{tpu_custom_call.1} parent=1 // loop_header_branch
      %18 = sbr.rel (%p16) target = $region8
    $region5: #{tpu_custom_call.1} parent=1 // loop_body
      %s20 = ssub.s32 %s15, 1
      %s21 = ssub.s32 %s15, 2
      %s22 = sadd.s32 %s15, 1
      %s23 = ssub.s32 %s15, %s22
      %p24 = scmp.eq.s32.totalorder %s23, 0
      %s26 = sadd.s32 %s25, 1
      %s27 = scalar_select %p24, %s25, %s26
      %p30 = pneg %p24
      %p31 = scmp.eq.s32.totalorder %s15, 1
      %p32 = por %p30, %p31
      %p33 = scmp.ne.s32.totalorder %s25, %s28
      %p34 = scmp.eq.s32.totalorder %s15, 0
      %p35 = por %p33, %p34
      %p36 = scmp.ne.s32.totalorder %s25, %s28
      %p37 = scmp.eq.s32.totalorder %s20, 1
      %p38 = por %p36, %p37
      %p39 = scmp.ne.s32.totalorder %s28, %s29
      %p40 = scmp.eq.s32.totalorder %s20, 0
      %p41 = por %p39, %p40
      %p42 = scmp.ne.s32.totalorder %s28, %s29
      %p43 = scmp.eq.s32.totalorder %s21, 1
      %p44 = por %p42, %p43
      %p46 = scmp.ne.s32.totalorder %s29, %s45
      %p47 = scmp.eq.s32.totalorder %s21, 0
      %p48 = por %p46, %p47
      %s50 = sadd.s32 %s49, 1
      %p53 = scmp.eq.s32.totalorder %s15, 1
      %p54 = scmp.ne.s32.totalorder %s49, %s51
      %p55 = scmp.eq.s32.totalorder %s15, 0
      %p56 = por %p54, %p55
      %p57 = scmp.ne.s32.totalorder %s49, %s51
      %p58 = scmp.eq.s32.totalorder %s20, 1
      %p59 = por %p57, %p58
      %p60 = scmp.ne.s32.totalorder %s51, %s52
      %p61 = scmp.eq.s32.totalorder %s20, 0
      %p62 = por %p60, %p61
      %p63 = scmp.ne.s32.totalorder %s51, %s52
      %p64 = scmp.eq.s32.totalorder %s21, 1
      %p65 = por %p63, %p64
      %p67 = scmp.ne.s32.totalorder %s52, %s66
      %p68 = scmp.eq.s32.totalorder %s21, 0
      %p69 = por %p67, %p68
      %s71 = sadd.s32 %s70, 1
      %p74 = scmp.eq.s32.totalorder %s15, 1
      %p75 = scmp.ne.s32.totalorder %s70, %s72
      %p76 = scmp.eq.s32.totalorder %s15, 0
      %p77 = por %p75, %p76
      %p78 = scmp.ne.s32.totalorder %s70, %s72
      %p79 = scmp.eq.s32.totalorder %s20, 1
      %p80 = por %p78, %p79
      %p81 = scmp.ne.s32.totalorder %s72, %s73
      %p82 = scmp.eq.s32.totalorder %s20, 0
      %p83 = por %p81, %p82
      %p84 = scmp.ne.s32.totalorder %s72, %s73
      %p85 = scmp.eq.s32.totalorder %s21, 1
      %p86 = por %p84, %p85
      %p88 = scmp.ne.s32.totalorder %s73, %s87
      %p89 = scmp.eq.s32.totalorder %s21, 0
      %p90 = por %p88, %p89
      %s91 = ssub.s32 %s15, %s22
      %p92 = scmp.eq.s32.totalorder %s91, 0
      %s94 = sadd.s32 %s93, 1
      %s95 = scalar_select %p92, %s93, %s94
      %p98 = pneg %p92
      %p99 = scmp.eq.s32.totalorder %s15, 1
      %p100 = por %p98, %p99
      %p101 = scmp.ne.s32.totalorder %s93, %s96
      %p102 = scmp.eq.s32.totalorder %s15, 0
      %p103 = por %p101, %p102
      %p104 = scmp.ne.s32.totalorder %s93, %s96
      %p105 = scmp.eq.s32.totalorder %s20, 1
      %p106 = por %p104, %p105
      %p107 = scmp.ne.s32.totalorder %s96, %s97
      %p108 = scmp.eq.s32.totalorder %s20, 0
      %p109 = por %p107, %p108
      %p110 = scmp.ne.s32.totalorder %s96, %s97
      %p111 = scmp.eq.s32.totalorder %s21, 1
      %p112 = por %p110, %p111
      %p114 = scmp.ne.s32.totalorder %s97, %s113
      %p115 = scmp.eq.s32.totalorder %s21, 0
      %p116 = por %p114, %p115
      %p117 = scmp.le.s32.totalorder 1, %s15
      %p118 = scmp.lt.s32.totalorder %s15, 3
      %p119 = pnand %p117, %p118
      %p120 = pneg %p119
      // Predicated region
      $region9: #{tpu_custom_call.1} parent=5 // pred_check
        _
      $region10: #{tpu_custom_call.1} parent=5 // pred_check_branch
        %122 = sbr.rel (%p119) target = $region12
      $region11: #{tpu_custom_call.1} parent=5 // pred_region
        %s123 = ssub.s32 %s15, 1
        // Predicated region
        $region13: #{tpu_custom_call.1} parent=11 // pred_check
          %p124 = pneg %p62
        $region14: #{tpu_custom_call.1} parent=11 // pred_check_branch
          %126 = sbr.rel (%p124) target = $region16
        $region15: #{tpu_custom_call.1} parent=11 // pred_region
          _
        $region16: #{tpu_custom_call.1} parent=11 // pred_fallthru
          _
        // Predicated region
        $region17: #{tpu_custom_call.1} parent=11 // pred_check
          %p127 = pneg %p83
        $region18: #{tpu_custom_call.1} parent=11 // pred_check_branch
          %129 = sbr.rel (%p127) target = $region20
        $region19: #{tpu_custom_call.1} parent=11 // pred_region
          _
        $region20: #{tpu_custom_call.1} parent=11 // pred_fallthru
          _
      $region12: #{tpu_custom_call.1} parent=5 // pred_fallthru
        _
      %p130 = scmp.lt.s32.totalorder %s15, 2
      // Predicated region
      $region21: #{tpu_custom_call.1} parent=5 // pred_check
        %p131 = pneg %p130
      $region22: #{tpu_custom_call.1} parent=5 // pred_check_branch
        %133 = sbr.rel (%p131) target = $region24
      $region23: #{tpu_custom_call.1} parent=5 // pred_region
        // Predicated region
        $region25: #{tpu_custom_call.1} parent=23 // pred_check
          %p134 = pneg %p35
        $region26: #{tpu_custom_call.1} parent=23 // pred_check_branch
          %136 = sbr.rel (%p134) target = $region28
        $region27: #{tpu_custom_call.1} parent=23 // pred_region
          %s137 = sand.u32 %s25, 1
          %s138 = scalar_lea.sflag [#allocation3], %s137
          %s139 = sand.u32 %s25, 1
          %s140 = smul.addr %s139, 128
          %s141 = scalar_lea.vmem [#allocation2], %s140
          %s143 = ssub.s32 2048, 2048
          %144 = vsyncadd %s138, %s143
          %s145 = smul.addr %s15, 16
          %s146 = smul.addr %s145, 128
          %s147 = scalar_lea.hbm %s0, %s146
          %s148 = sshll.u32 %s141, 4
          %s149 = int_to_ptr.vmem [resolvable:$true] %s148
          %154 = dma.hbm_to_vmem [thread:$0]  %s147, 2048, %s149, %s138, 256, 256, 16
        $region28: #{tpu_custom_call.1} parent=23 // pred_fallthru
          _
      $region24: #{tpu_custom_call.1} parent=5 // pred_fallthru
        _
      %p155 = scmp.le.s32.totalorder 1, %s15
      %p156 = scmp.lt.s32.totalorder %s15, 3
      %p157 = pnand %p155, %p156
      %p158 = pneg %p157
      // Predicated region
      $region29: #{tpu_custom_call.1} parent=5 // pred_check
        _
      $region30: #{tpu_custom_call.1} parent=5 // pred_check_branch
        %160 = sbr.rel (%p157) target = $region32
      $region31: #{tpu_custom_call.1} parent=5 // pred_region
        %s161 = ssub.s32 %s15, 1
        %s162 = sand.u32 %s28, 1
        %s163 = scalar_lea.sflag [#allocation3], %s162
        %s164 = sand.u32 %s28, 1
        %s165 = smul.addr %s164, 128
        %s166 = scalar_lea.vmem [#allocation2], %s165
        // Predicated region
        $region33: #{tpu_custom_call.1} parent=31 // pred_check
          %p167 = pneg %p41
        $region34: #{tpu_custom_call.1} parent=31 // pred_check_branch
          %169 = sbr.rel (%p167) target = $region36
        $region35: #{tpu_custom_call.1} parent=31 // pred_region
          %170 = dma.done %s163, 2048
        $region36: #{tpu_custom_call.1} parent=31 // pred_fallthru
          _
        %s171 = sand.u32 %s28, 1
        %s172 = scalar_lea.sflag [#allocation3], %s171
        %s173 = sand.u32 %s28, 1
        %s174 = smul.addr %s173, 128
        %s175 = scalar_lea.vmem [#allocation2], %s174
        %p176 = pneg %p41
        %p177 = pneg %p38
        %p178 = pneg %p62
        %p179 = pneg %p59
        %p180 = pneg %p83
        %p181 = pneg %p80
        %p182 = pneg %p109
        %p183 = pneg %p106
        %s184 = sand.u32 %s96, 1
        %s185 = scalar_lea.sflag [#allocation4], %s184
        %s186 = sand.u32 %s96, 1
        %s187 = smul.addr %s186, 128
        %s188 = scalar_lea.vmem [#allocation5], %s187
        %v189 = vld [vmem:[%s166] sm:$0xff]
        %v190 = vld [vmem:[%s166 + $0x8] sm:$0xff]
        %v191 = vld [vmem:[%s166 + $0x10] sm:$0xff]
        %v192 = vld [vmem:[%s166 + $0x18] sm:$0xff]
        %v193 = vld [vmem:[%s166 + $0x20] sm:$0xff]
        %v194 = vld [vmem:[%s166 + $0x28] sm:$0xff]
        %v195 = vld [vmem:[%s166 + $0x30] sm:$0xff]
        %v196 = vld [vmem:[%s166 + $0x38] sm:$0xff]
        %v197 = vld [vmem:[%s166 + $0x40] sm:$0xff]
        %v198 = vld [vmem:[%s166 + $0x48] sm:$0xff]
        %v199 = vld [vmem:[%s166 + $0x50] sm:$0xff]
        %v200 = vld [vmem:[%s166 + $0x58] sm:$0xff]
        %v201 = vld [vmem:[%s166 + $0x60] sm:$0xff]
        %v202 = vld [vmem:[%s166 + $0x68] sm:$0xff]
        %v203 = vld [vmem:[%s166 + $0x70] sm:$0xff]
        %v204 = vld [vmem:[%s166 + $0x78] sm:$0xff]
        %v205 = vadd.f32 %v189, %v190
        %206 = vadd.xlane.f32.xlu0 %v205
        %v207 = vpop.xlane.xlu0 %206
        %v208 = vadd.f32 %v191, %v192
        %209 = vadd.xlane.f32.xlu0 %v208
        %v210 = vpop.xlane.xlu0 %209
        %v211 = vadd.f32 %v193, %v194
        %212 = vadd.xlane.f32.xlu0 %v211
        %v213 = vpop.xlane.xlu0 %212
        %v214 = vadd.f32 %v195, %v196
        %215 = vadd.xlane.f32.xlu0 %v214
        %v216 = vpop.xlane.xlu0 %215
        %v217 = vadd.f32 %v197, %v198
        %218 = vadd.xlane.f32.xlu0 %v217
        %v219 = vpop.xlane.xlu0 %218
        %v220 = vadd.f32 %v199, %v200
        %221 = vadd.xlane.f32.xlu0 %v220
        %v222 = vpop.xlane.xlu0 %221
        %v223 = vadd.f32 %v201, %v202
        %224 = vadd.xlane.f32.xlu0 %v223
        %v225 = vpop.xlane.xlu0 %224
        %v226 = vadd.f32 %v203, %v204
        %227 = vadd.xlane.f32.xlu0 %v226
        %v228 = vpop.xlane.xlu0 %227
        %v229 = vmul.f32 %v207, 0.00390625
        %v230 = vmul.f32 %v210, 0.00390625
        %v231 = vmul.f32 %v213, 0.00390625
        %v232 = vmul.f32 %v216, 0.00390625
        %v233 = vmul.f32 %v219, 0.00390625
        %v234 = vmul.f32 %v222, 0.00390625
        %v235 = vmul.f32 %v225, 0.00390625
        %v236 = vmul.f32 %v228, 0.00390625
        %v237 = vld [vmem:[%s1] sm:$0xff]
        %v238 = vld [vmem:[%s1 + $0x8] sm:$0xff]
        %v239 = vld [vmem:[%s1 + $0x10] sm:$0xff]
        %v240 = vld [vmem:[%s1 + $0x18] sm:$0xff]
        %v241 = vld [vmem:[%s1 + $0x20] sm:$0xff]
        %v242 = vld [vmem:[%s1 + $0x28] sm:$0xff]
        %v243 = vld [vmem:[%s1 + $0x30] sm:$0xff]
        %v244 = vld [vmem:[%s1 + $0x38] sm:$0xff]
        %v253 = vlaneseq
        %v254 = vand.u32 %v253, 127
        %v255 = vlaneseq
        %v256 = vshrl.u32 %v255, 7
        %v257 = vsub.s32 %v254, %v256
        %v258 = vrot.slane %v229, %v257
        %v259 = vadd.s32 %v254, 4294967288
        %v260 = vlaneseq
        %v261 = vshrl.u32 %v260, 7
        %v262 = vsub.s32 %v259, %v261
        %v263 = vrot.slane %v230, %v262
        %vm264 = vcmask 130112
        %v265 = vsel %vm264, %v263, %v258
        %v266 = vadd.s32 %v254, 4294967280
        %v267 = vlaneseq
        %v268 = vshrl.u32 %v267, 7
        %v269 = vsub.s32 %v266, %v268
        %v270 = vrot.slane %v231, %v269
        %vm271 = vcmask 195712
        %v272 = vsel %vm271, %v270, %v265
        %v273 = vadd.s32 %v254, 4294967272
        %v274 = vlaneseq
        %v275 = vshrl.u32 %v274, 7
        %v276 = vsub.s32 %v273, %v275
        %v277 = vrot.slane %v232, %v276
        %vm278 = vcmask 261312
        %v279 = vsel %vm278, %v277, %v272
        %v280 = vadd.s32 %v254, 4294967264
        %v281 = vlaneseq
        %v282 = vshrl.u32 %v281, 7
        %v283 = vsub.s32 %v280, %v282
        %v284 = vrot.slane %v233, %v283
        %vm285 = vcmask 326912
        %v286 = vsel %vm285, %v284, %v279
        %v287 = vadd.s32 %v254, 4294967256
        %v288 = vlaneseq
        %v289 = vshrl.u32 %v288, 7
        %v290 = vsub.s32 %v287, %v289
        %v291 = vrot.slane %v234, %v290
        %vm292 = vcmask 392512
        %v293 = vsel %vm292, %v291, %v286
        %v294 = vadd.s32 %v254, 4294967248
        %v295 = vlaneseq
        %v296 = vshrl.u32 %v295, 7
        %v297 = vsub.s32 %v294, %v296
        %v298 = vrot.slane %v235, %v297
        %vm299 = vcmask 458112
        %v300 = vsel %vm299, %v298, %v293
        %v301 = vadd.s32 %v254, 4294967240
        %v302 = vlaneseq
        %v303 = vshrl.u32 %v302, 7
        %v304 = vsub.s32 %v301, %v303
        %v305 = vrot.slane %v236, %v304
        %vm306 = vcmask 523712
        %v307 = vsel %vm306, %v305, %v300
        %vm308 = vcmask 523264
        %v309 = vsel %vm308, %v307, 0
        %311 = vmatprep.subr.mxu0 0.0
        %312 = vmatpush1.msra.mxu0 %v237
        %313 = vmatprep.subr.mxu0 0.0
        %314 = vmatpush1.msra.mxu0 %v238
        %315 = vmatprep.subr.mxu0 0.0
        %316 = vmatpush1.msra.mxu0 %v239
        %317 = vmatprep.subr.mxu0 0.0
        %318 = vmatpush1.msra.mxu0 %v240
        %319 = vmatprep.subr.mxu0 0.0
        %320 = vmatpush1.msra.mxu0 %v241
        %321 = vmatprep.subr.mxu0 0.0
        %322 = vmatpush1.msra.mxu0 %v242
        %323 = vmatprep.subr.mxu0 0.0
        %324 = vmatpush1.msra.mxu0 %v243
        %325 = vmatprep.subr.mxu0 0.0
        %326 = vmatpush1.msra.mxu0 %v244
        %327 = vmatprep.subr.mxu0 0.0
        %328 = vmatpush1.msra.mxu0 0.0
        %329 = vmatprep.subr.mxu0 0.0
        %330 = vmatpush1.msra.mxu0 0.0
        %331 = vmatprep.subr.mxu0 0.0
        %332 = vmatpush1.msra.mxu0 0.0
        %333 = vmatprep.subr.mxu0 0.0
        %334 = vmatpush1.msra.mxu0 0.0
        %335 = vmatprep.subr.mxu0 0.0
        %336 = vmatpush1.msra.mxu0 0.0
        %337 = vmatprep.subr.mxu0 0.0
        %338 = vmatpush1.msra.mxu0 0.0
        %339 = vmatprep.subr.mxu0 0.0
        %340 = vmatpush1.msra.mxu0 0.0
        %341 = vmatprep.subr.mxu0 0.0
        %342 = vmatpush1.msra.mxu0 0.0
        %343 = vmatprep.subr.mxu0 0.0
        %344 = vmatpush1.msra.mxu0 0.0
        %345 = vmatprep.subr.mxu0 0.0
        %346 = vmatpush1.msra.mxu0 0.0
        %347 = vmatprep.subr.mxu0 0.0
        %348 = vmatpush1.msra.mxu0 0.0
        %349 = vmatprep.subr.mxu0 0.0
        %350 = vmatpush1.msra.mxu0 0.0
        %351 = vmatprep.subr.mxu0 0.0
        %352 = vmatpush1.msra.mxu0 0.0
        %353 = vmatprep.subr.mxu0 0.0
        %354 = vmatpush1.msra.mxu0 0.0
        %355 = vmatprep.subr.mxu0 0.0
        %356 = vmatpush1.msra.mxu0 0.0
        %357 = vmatprep.subr.mxu0 0.0
        %358 = vmatpush1.msra.mxu0 0.0
        %359 = vmatprep.subr.mxu0 0.0
        %360 = vmatpush1.msra.mxu0 0.0
        %361 = vmatprep.subr.mxu0 0.0
        %362 = vmatpush1.msra.mxu0 0.0
        %363 = vmatprep.subr.mxu0 0.0
        %364 = vmatpush1.msra.mxu0 0.0
        %365 = vmatprep.subr.mxu0 0.0
        %366 = vmatpush1.msra.mxu0 0.0
        %367 = vmatprep.subr.mxu0 0.0
        %368 = vmatpush1.msra.mxu0 0.0
        %369 = vmatprep.subr.mxu0 0.0
        %370 = vmatpush1.msra.mxu0 0.0
        %371 = vmatprep.subr.mxu0 0.0
        %372 = vmatpush1.msra.mxu0 0.0
        %373 = vmatprep.subr.mxu0 0.0
        %374 = vmatpush1.msra.mxu0 0.0
        %375 = vmatprep.mubr.f32.mxu0 0.0
        %376 = vmatmul.mubr.f32.gmra.mrb[0].mxu0 %v309
        %v377 = vpop.f32.mrb[0].mxu0
        %v378 = vadd.f32 0.0, %v377
        %v379 = vpop.f32.mrb[0].mxu0
        %380 = vdwg.mxu0
        %v381 = vmax.f32 %v378, 0.0
        %v382 = vld [vmem:[%s2] sm:$0xf]
        %vm383 = vcmask 31744
        %v385 = vsel %vm383, %v381, 0
        %vm387 = vcmask 1043456
        %v389 = vsel %vm387, %v382, 0
        %391 = vmatprep.subr.mxu0 0.0
        %392 = vmatpush1.msra.mxu0 %v389
        %393 = vmatprep.subr.mxu0 0.0
        %394 = vmatpush1.msra.mxu0 0.0
        %395 = vmatprep.subr.mxu0 0.0
        %396 = vmatpush1.msra.mxu0 0.0
        %397 = vmatprep.subr.mxu0 0.0
        %398 = vmatpush1.msra.mxu0 0.0
        %399 = vmatprep.subr.mxu0 0.0
        %400 = vmatpush1.msra.mxu0 0.0
        %401 = vmatprep.subr.mxu0 0.0
        %402 = vmatpush1.msra.mxu0 0.0
        %403 = vmatprep.subr.mxu0 0.0
        %404 = vmatpush1.msra.mxu0 0.0
        %405 = vmatprep.subr.mxu0 0.0
        %406 = vmatpush1.msra.mxu0 0.0
        %407 = vmatprep.subr.mxu0 0.0
        %408 = vmatpush1.msra.mxu0 0.0
        %409 = vmatprep.subr.mxu0 0.0
        %410 = vmatpush1.msra.mxu0 0.0
        %411 = vmatprep.subr.mxu0 0.0
        %412 = vmatpush1.msra.mxu0 0.0
        %413 = vmatprep.subr.mxu0 0.0
        %414 = vmatpush1.msra.mxu0 0.0
        %415 = vmatprep.subr.mxu0 0.0
        %416 = vmatpush1.msra.mxu0 0.0
        %417 = vmatprep.subr.mxu0 0.0
        %418 = vmatpush1.msra.mxu0 0.0
        %419 = vmatprep.subr.mxu0 0.0
        %420 = vmatpush1.msra.mxu0 0.0
        %421 = vmatprep.subr.mxu0 0.0
        %422 = vmatpush1.msra.mxu0 0.0
        %423 = vmatprep.subr.mxu0 0.0
        %424 = vmatpush1.msra.mxu0 0.0
        %425 = vmatprep.subr.mxu0 0.0
        %426 = vmatpush1.msra.mxu0 0.0
        %427 = vmatprep.subr.mxu0 0.0
        %428 = vmatpush1.msra.mxu0 0.0
        %429 = vmatprep.subr.mxu0 0.0
        %430 = vmatpush1.msra.mxu0 0.0
        %431 = vmatprep.subr.mxu0 0.0
        %432 = vmatpush1.msra.mxu0 0.0
        %433 = vmatprep.subr.mxu0 0.0
        %434 = vmatpush1.msra.mxu0 0.0
        %435 = vmatprep.subr.mxu0 0.0
        %436 = vmatpush1.msra.mxu0 0.0
        %437 = vmatprep.subr.mxu0 0.0
        %438 = vmatpush1.msra.mxu0 0.0
        %439 = vmatprep.subr.mxu0 0.0
        %440 = vmatpush1.msra.mxu0 0.0
        %441 = vmatprep.subr.mxu0 0.0
        %442 = vmatpush1.msra.mxu0 0.0
        %443 = vmatprep.subr.mxu0 0.0
        %444 = vmatpush1.msra.mxu0 0.0
        %445 = vmatprep.subr.mxu0 0.0
        %446 = vmatpush1.msra.mxu0 0.0
        %447 = vmatprep.subr.mxu0 0.0
        %448 = vmatpush1.msra.mxu0 0.0
        %449 = vmatprep.subr.mxu0 0.0
        %450 = vmatpush1.msra.mxu0 0.0
        %451 = vmatprep.subr.mxu0 0.0
        %452 = vmatpush1.msra.mxu0 0.0
        %453 = vmatprep.subr.mxu0 0.0
        %454 = vmatpush1.msra.mxu0 0.0
        %455 = vmatprep.mubr.f32.mxu0 0.0
        %456 = vmatmul.mubr.f32.gmra.mrb[0].mxu0 %v385
        %v457 = vpop.f32.mrb[0].mxu0
        %v458 = vadd.f32 0.0, %v457
        %v459 = vpop.f32.mrb[0].mxu0
        %460 = vdwg.mxu0
        %v461 = vsub.f32 0.0, %v458
        %v462 = vmul.f32 %v461, 1.442695
        %v463 = vpow.pop %v462
        %v464 = vadd.f32 %v463, 1.0
        %v465 = vrcp.pop %v464
        %v466 = vlaneseq
        %v467 = vshrl.u32 %v466, 7
        %v468 = vsub.s32 0, %v467
        %v469 = vrot.slane %v465, %v468
        %471 = vbcast.lane.b32.xlu0 %v469, 256
        %v472 = vpop.permute.xlu0 %471
        %s474 = sor.u32 256, 8
        %475 = vbcast.lane.b32.xlu0 %v469, %s474
        %v476 = vpop.permute.xlu0 %475
        %s478 = sor.u32 256, 16
        %479 = vbcast.lane.b32.xlu0 %v469, %s478
        %v480 = vpop.permute.xlu0 %479
        %s482 = sor.u32 256, 24
        %483 = vbcast.lane.b32.xlu0 %v469, %s482
        %v484 = vpop.permute.xlu0 %483
        %s486 = sor.u32 256, 32
        %487 = vbcast.lane.b32.xlu0 %v469, %s486
        %v488 = vpop.permute.xlu0 %487
        %s490 = sor.u32 256, 40
        %491 = vbcast.lane.b32.xlu0 %v469, %s490
        %v492 = vpop.permute.xlu0 %491
        %s494 = sor.u32 256, 48
        %495 = vbcast.lane.b32.xlu0 %v469, %s494
        %v496 = vpop.permute.xlu0 %495
        %s498 = sor.u32 256, 56
        %499 = vbcast.lane.b32.xlu0 %v469, %s498
        %v500 = vpop.permute.xlu0 %499
        %v501 = vmul.f32 %v189, %v472
        %v502 = vmul.f32 %v190, %v472
        %v503 = vmul.f32 %v191, %v476
        %v504 = vmul.f32 %v192, %v476
        %v505 = vmul.f32 %v193, %v480
        %v506 = vmul.f32 %v194, %v480
        %v507 = vmul.f32 %v195, %v484
        %v508 = vmul.f32 %v196, %v484
        %v509 = vmul.f32 %v197, %v488
        %v510 = vmul.f32 %v198, %v488
        %v511 = vmul.f32 %v199, %v492
        %v512 = vmul.f32 %v200, %v492
        %v513 = vmul.f32 %v201, %v496
        %v514 = vmul.f32 %v202, %v496
        %v515 = vmul.f32 %v203, %v500
        %v516 = vmul.f32 %v204, %v500
        %517 = vst [vmem:[%s188] sm:$0xff] %v501
        %518 = vst [vmem:[%s188 + $0x8] sm:$0xff] %v502
        %519 = vst [vmem:[%s188 + $0x10] sm:$0xff] %v503
        %520 = vst [vmem:[%s188 + $0x18] sm:$0xff] %v504
        %521 = vst [vmem:[%s188 + $0x20] sm:$0xff] %v505
        %522 = vst [vmem:[%s188 + $0x28] sm:$0xff] %v506
        %523 = vst [vmem:[%s188 + $0x30] sm:$0xff] %v507
        %524 = vst [vmem:[%s188 + $0x38] sm:$0xff] %v508
        %525 = vst [vmem:[%s188 + $0x40] sm:$0xff] %v509
        %526 = vst [vmem:[%s188 + $0x48] sm:$0xff] %v510
        %527 = vst [vmem:[%s188 + $0x50] sm:$0xff] %v511
        %528 = vst [vmem:[%s188 + $0x58] sm:$0xff] %v512
        %529 = vst [vmem:[%s188 + $0x60] sm:$0xff] %v513
        %530 = vst [vmem:[%s188 + $0x68] sm:$0xff] %v514
        %531 = vst [vmem:[%s188 + $0x70] sm:$0xff] %v515
        %532 = vst [vmem:[%s188 + $0x78] sm:$0xff] %v516
        %s533 = sand.u32 %s96, 1
        %s534 = scalar_lea.sflag [#allocation4], %s533
        %s535 = sand.u32 %s96, 1
        %s536 = smul.addr %s535, 128
        %s537 = scalar_lea.vmem [#allocation5], %s536
        // Predicated region
        $region37: #{tpu_custom_call.1} parent=31 // pred_check
          %p538 = pneg %p106
        $region38: #{tpu_custom_call.1} parent=31 // pred_check_branch
          %540 = sbr.rel (%p538) target = $region40
        $region39: #{tpu_custom_call.1} parent=31 // pred_region
          %s542 = ssub.s32 2048, 2048
          %543 = vsyncadd %s534, %s542
          %s544 = smul.addr %s20, 16
          %s545 = smul.addr %s544, 128
          %s546 = scalar_lea.hbm %s3, %s545
          %s547 = sshll.u32 %s537, 4
          %s548 = int_to_ptr.vmem [resolvable:$true] %s547
          %553 = dma.vmem_to_hbm [thread:$0]  %s548, 2048, %s546, %s534, 256, 256, 16
        $region40: #{tpu_custom_call.1} parent=31 // pred_fallthru
          _
      $region32: #{tpu_custom_call.1} parent=5 // pred_fallthru
        _
      %p554 = scmp.le.s32.totalorder 2, %s15
      // Predicated region
      $region41: #{tpu_custom_call.1} parent=5 // pred_check
        %p555 = pneg %p554
      $region42: #{tpu_custom_call.1} parent=5 // pred_check_branch
        %557 = sbr.rel (%p555) target = $region44
      $region43: #{tpu_custom_call.1} parent=5 // pred_region
        %s558 = ssub.s32 %s15, 2
        // Predicated region
        $region45: #{tpu_custom_call.1} parent=43 // pred_check
          %p559 = pneg %p112
        $region46: #{tpu_custom_call.1} parent=43 // pred_check_branch
          %561 = sbr.rel (%p559) target = $region48
        $region47: #{tpu_custom_call.1} parent=43 // pred_region
          %s562 = sand.u32 %s97, 1
          %s563 = scalar_lea.sflag [#allocation4], %s562
          %s564 = sand.u32 %s97, 1
          %s565 = smul.addr %s564, 128
          %s566 = scalar_lea.vmem [#allocation5], %s565
          %567 = dma.done %s563, 2048
        $region48: #{tpu_custom_call.1} parent=43 // pred_fallthru
          _
      $region44: #{tpu_custom_call.1} parent=5 // pred_fallthru
        _
    $region6: #{tpu_custom_call.1} parent=1 // loop_footer
      %s19 = sadd.s32 1, %s15
    $region7: #{tpu_custom_call.1} parent=1 // loop_footer_branch
      %14 = sbr.rel target = $region3
    $region8: #{tpu_custom_call.1} parent=1 // loop_exit
      _
    %568 = vsyncpa [#allocation3], 1
    %s569 = scalar_lea.sflag [#allocation3], 1
    %570 = vsyncpa %s569, 1
    %571 = vsyncpa [#allocation4], 1
    %s572 = scalar_lea.sflag [#allocation4], 1
    %573 = vsyncpa %s572, 1

</llo_original>
